<compile_context>
chip_gen: v6e
topology: v6e:2x2x1
jax: 0.10.0
libtpu: 0.0.40
codegen_flags: <defaults>
</compile_context>

<pallas_src>
import functools

import jax
import jax.numpy as jnp
from jax.experimental import pallas as pl
from jax.experimental.pallas import tpu as pltpu

_LANE = 128
_BF16_SUBLANE_TILE = 16  # a packed bf16 vreg tile is (16, 128)


def _round_up(x, m):
    return ((x + m - 1) // m) * m


def _cdiv(a, b):
    return (a + b - 1) // b


def _actor_kernel(max_action, x_ref, w1_ref, b1_ref, w2_ref, b2_ref,
                  w3_ref, b3_ref, out_ref):
    """One batch tile: three MXU matmuls with f32 accumulation + f32 elementwise."""
    x = x_ref[...]  # (TB, S_pad) bf16

    # fc1 + relu (bias add / relu in f32; v5e has no bf16 VPU)
    h1 = jnp.dot(x, w1_ref[...], preferred_element_type=jnp.float32)
    h1 = jnp.maximum(h1 + b1_ref[...], 0.0)

    # fc2 + relu
    h2 = jnp.dot(h1.astype(jnp.bfloat16), w2_ref[...],
                 preferred_element_type=jnp.float32)
    h2 = jnp.maximum(h2 + b2_ref[...], 0.0)

    # fc3 + bias + tanh * max_action (EUP tanh, VPU scale)
    h3 = jnp.dot(h2.astype(jnp.bfloat16), w3_ref[...],
                 preferred_element_type=jnp.float32)
    out_ref[...] = jnp.tanh(h3 + b3_ref[...]) * max_action


def prepare_params(params, state_dim, action_dim):
    """Zero-pad every feature dim to a multiple of 128 and cast weights to bf16.

    Zero padding is exact: padded input columns are zero, padded hidden lanes get
    bias 0 -> relu(0)=0 and contribute nothing downstream; padded output lanes are
    sliced off in the wrapper.
    """
    s_pad = _round_up(state_dim, _LANE)
    h1_pad = _round_up(400, _LANE)   # 512
    h2_pad = _round_up(300, _LANE)   # 384 (do NOT pad to 512 — kernel is DMA-bound)
    a_pad = _round_up(action_dim, _LANE)

    def pad2(a, rows, cols):
        return jnp.pad(a, ((0, rows - a.shape[0]), (0, cols - a.shape[1])))

    return {
        "W1": pad2(params["W1"], s_pad, h1_pad).astype(jnp.bfloat16),
        "b1": pad2(params["b1"], 1, h1_pad).astype(jnp.float32),
        "W2": pad2(params["W2"], h1_pad, h2_pad).astype(jnp.bfloat16),
        "b2": pad2(params["b2"], 1, h2_pad).astype(jnp.float32),
        "W3": pad2(params["W3"], h2_pad, a_pad).astype(jnp.bfloat16),
        "b3": pad2(params["b3"], 1, a_pad).astype(jnp.float32),
    }


def _resident_spec(shape):
    """BlockSpec for a grid-constant operand: stays VMEM-resident across steps.

    Single-buffer it (pl.Buffered(1)) when the installed JAX exposes pipeline_mode;
    with a constant index_map no re-DMA happens, so one buffer suffices and the
    resident weight footprint halves.
    """
    index_map = lambda i: (0, 0)
    if hasattr(pl, "Buffered"):
        try:
            return pl.BlockSpec(shape, index_map, pipeline_mode=pl.Buffered(1))
        except TypeError:  # older BlockSpec without pipeline_mode kwarg
            pass
    return pl.BlockSpec(shape, index_map)


def actor_forward(state, padded_params, max_action, action_dim):
    """state: (B, state_dim) float32. padded_params: output of prepare_params."""
    B, S = state.shape
    p = padded_params
    s_pad = p["W1"].shape[0]
    a_pad = p["W3"].shape[1]

    # Batch tile selection:
    #  * B < 128: round up to the 16-row bf16 packed sublane tile (dense layout).
    #  * B >= 128: 128..512-row tiles; sized as ~B/2 so the grid keeps >= 2 steps
    #    (both v7x TensorCores used via the "parallel" axis) while large enough to
    #    amortize the ~0.35us per-grid-step overhead.
    if B < _LANE:
        tb = _round_up(max(B, 1), _BF16_SUBLANE_TILE)
    else:
        tb = min(512, _round_up(_cdiv(B, 2), _LANE))
    b_pad = _round_up(B, tb)
    grid = (b_pad // tb,)

    # Pad state to (b_pad, s_pad) and cast to bf16 (MXU input dtype).
    x = jnp.pad(state, ((0, b_pad - B), (0, s_pad - S))).astype(jnp.bfloat16)

    weight_args = (p["W1"], p["b1"], p["W2"], p["b2"], p["W3"], p["b3"])
    in_specs = [pl.BlockSpec((tb, s_pad), lambda i: (i, 0))]          # state tile
    in_specs += [_resident_spec(w.shape) for w in weight_args]        # resident W/b

    out_padded = pl.pallas_call(
        functools.partial(_actor_kernel, float(max_action)),
        out_shape=jax.ShapeDtypeStruct((b_pad, a_pad), jnp.float32),
        grid=grid,
        in_specs=in_specs,
        out_specs=pl.BlockSpec((tb, a_pad), lambda i: (i, 0)),
        compiler_params=pltpu.CompilerParams(
            dimension_semantics=("parallel",),
            vmem_limit_bytes=32 << 20,
        ),
    )(x, *weight_args)

    # Strip batch / lane padding (pure layout plumbing in the wrapper).
    return out_padded[:B, :action_dim]


def init_params(key, state_dim, action_dim):
    """Deterministic synthetic init matching nn.Linear shapes (stored as (in, out))."""
    k1, k2, k3, k4, k5, k6 = jax.random.split(key, 6)

    def uniform(k, shape, fan_in):
        bound = 1.0 / jnp.sqrt(fan_in)
        return jax.random.uniform(k, shape, jnp.float32, -bound, bound)

    return {
        "W1": uniform(k1, (state_dim, 400), state_dim),
        "b1": uniform(k2, (1, 400), state_dim),
        "W2": uniform(k3, (400, 300), 400),
        "b2": uniform(k4, (1, 300), 400),
        "W3": uniform(k5, (300, action_dim), 300),
        "b3": uniform(k6, (1, action_dim), 300),
    }


def actor_reference_f32(state, params, max_action):
    """Full-precision pure-JAX reference."""
    a = jnp.maximum(state @ params["W1"] + params["b1"], 0.0)
    a = jnp.maximum(a @ params["W2"] + params["b2"], 0.0)
    return jnp.tanh(a @ params["W3"] + params["b3"]) * max_action


def actor_reference_bf16(state, params, max_action):
    """Reference using the same bf16-input / f32-accumulate matmul recipe."""
    def mm(x, w):
        return jnp.dot(x.astype(jnp.bfloat16), w.astype(jnp.bfloat16),
                       preferred_element_type=jnp.float32)
    a = jnp.maximum(mm(state, params["W1"]) + params["b1"], 0.0)
    a = jnp.maximum(mm(a, params["W2"]) + params["b2"], 0.0)
    return jnp.tanh(mm(a, params["W3"]) + params["b3"]) * max_action


def _check(state, params, padded, max_action, action_dim):
    out = actor_forward(state, padded, max_action, action_dim)
    out = jax.block_until_ready(out)
    assert out.shape == (state.shape[0], action_dim), out.shape

    # Tight check against the identical bf16-matmul recipe; loose sanity check
    # against full f32 (bf16 weights introduce small relative error; outputs in [-2,2]).
    ref_bf16 = actor_reference_bf16(state, params, max_action)
    ref_f32 = actor_reference_f32(state, params, max_action)
    assert jnp.allclose(out, ref_bf16, atol=2e-3, rtol=2e-3), (out, ref_bf16)
    assert jnp.allclose(out, ref_f32, atol=1e-1, rtol=1e-1), (out, ref_f32)
    return out


if __name__ == "__main__":
    key = jax.random.PRNGKey(0)
    k_params, k_state_small, k_state_big = jax.random.split(key, 3)

    state_dim = 16
    action_dim = 4
    max_action = 2.0

    params = init_params(k_params, state_dim, action_dim)
    padded = prepare_params(params, state_dim, action_dim)

    # Small batch (single 16-row tile, grid=(1,)).
    state_small = jax.random.normal(k_state_small, (2, state_dim), dtype=jnp.float32)
    _check(state_small, params, padded, max_action, action_dim)

    # Larger batch exercising the multi-step grid path (tb=128, grid=(2,)).
    state_big = jax.random.normal(k_state_big, (160, state_dim), dtype=jnp.float32)
    _check(state_big, params, padded, max_action, action_dim)

    print("KERNEL_OK")
</pallas_src>

<mosaic_0001>
module attributes {stable_mosaic.version = 11 : i64} {
  func.func @_actor_kernel(%arg0: i32, %arg1: memref<16x128xbf16, #tpu.memory_space<vmem>>, %arg2: memref<128x512xbf16, #tpu.memory_space<vmem>>, %arg3: memref<1x512xf32, #tpu.memory_space<vmem>>, %arg4: memref<512x384xbf16, #tpu.memory_space<vmem>>, %arg5: memref<1x384xf32, #tpu.memory_space<vmem>>, %arg6: memref<384x128xbf16, #tpu.memory_space<vmem>>, %arg7: memref<1x128xf32, #tpu.memory_space<vmem>>, %arg8: memref<16x128xf32, #tpu.memory_space<vmem>>) attributes {dimension_semantics = [#tpu.dimension_semantics<parallel>], iteration_bounds = array<i64: 1>, scalar_prefetch = 0 : i64, scratch_operands = 0 : i64, tpu.core_type = #tpu.core_type<tc>, window_params = [{transform_indices = @transform_0, window_bounds = array<i64: 16, 128>}, {pipeline_mode = #tpu.pipeline_mode<synchronous>, transform_indices = @transform_1, window_bounds = array<i64: 128, 512>}, {pipeline_mode = #tpu.pipeline_mode<synchronous>, transform_indices = @transform_2, window_bounds = array<i64: 1, 512>}, {pipeline_mode = #tpu.pipeline_mode<synchronous>, transform_indices = @transform_3, window_bounds = array<i64: 512, 384>}, {pipeline_mode = #tpu.pipeline_mode<synchronous>, transform_indices = @transform_4, window_bounds = array<i64: 1, 384>}, {pipeline_mode = #tpu.pipeline_mode<synchronous>, transform_indices = @transform_5, window_bounds = array<i64: 384, 128>}, {pipeline_mode = #tpu.pipeline_mode<synchronous>, transform_indices = @transform_6, window_bounds = array<i64: 1, 128>}, {transform_indices = @transform_7, window_bounds = array<i64: 16, 128>}]} {
    %c0 = arith.constant 0 : index
    %c0_0 = arith.constant 0 : index
    %0 = vector.load %arg1[%c0, %c0_0] : memref<16x128xbf16, #tpu.memory_space<vmem>>, vector<16x128xbf16>
    %c0_1 = arith.constant 0 : index
    %c0_2 = arith.constant 0 : index
    %1 = vector.load %arg2[%c0_1, %c0_2] : memref<128x512xbf16, #tpu.memory_space<vmem>>, vector<128x512xbf16>
    %cst = arith.constant dense<0.000000e+00> : vector<16x512xf32>
    %2 = tpu.matmul %0, %1, %cst {dimension_numbers = #tpu.dot_dimension_numbers<[1], [0], [0], [1], [0, 0, 1, 1], [], []>} : vector<16x128xbf16>, vector<128x512xbf16>, vector<16x512xf32> -> vector<16x512xf32>
    %c0_3 = arith.constant 0 : index
    %c0_4 = arith.constant 0 : index
    %3 = vector.load %arg3[%c0_3, %c0_4] : memref<1x512xf32, #tpu.memory_space<vmem>>, vector<1x512xf32>
    %4 = vector.broadcast %3 : vector<1x512xf32> to vector<16x512xf32>
    %5 = arith.addf %2, %4 : vector<16x512xf32>
    %cst_5 = arith.constant 0.000000e+00 : f32
    %6 = vector.broadcast %cst_5 : f32 to vector<16x512xf32>
    %7 = arith.maximumf %5, %6 : vector<16x512xf32>
    %8 = arith.truncf %7 : vector<16x512xf32> to vector<16x512xbf16>
    %c0_6 = arith.constant 0 : index
    %c0_7 = arith.constant 0 : index
    %9 = vector.load %arg4[%c0_6, %c0_7] : memref<512x384xbf16, #tpu.memory_space<vmem>>, vector<512x384xbf16>
    %cst_8 = arith.constant dense<0.000000e+00> : vector<16x384xf32>
    %10 = tpu.matmul %8, %9, %cst_8 {dimension_numbers = #tpu.dot_dimension_numbers<[1], [0], [0], [1], [0, 0, 1, 1], [], []>} : vector<16x512xbf16>, vector<512x384xbf16>, vector<16x384xf32> -> vector<16x384xf32>
    %c0_9 = arith.constant 0 : index
    %c0_10 = arith.constant 0 : index
    %11 = vector.load %arg5[%c0_9, %c0_10] : memref<1x384xf32, #tpu.memory_space<vmem>>, vector<1x384xf32>
    %12 = vector.broadcast %11 : vector<1x384xf32> to vector<16x384xf32>
    %13 = arith.addf %10, %12 : vector<16x384xf32>
    %cst_11 = arith.constant 0.000000e+00 : f32
    %14 = vector.broadcast %cst_11 : f32 to vector<16x384xf32>
    %15 = arith.maximumf %13, %14 : vector<16x384xf32>
    %16 = arith.truncf %15 : vector<16x384xf32> to vector<16x384xbf16>
    %c0_12 = arith.constant 0 : index
    %c0_13 = arith.constant 0 : index
    %17 = vector.load %arg6[%c0_12, %c0_13] : memref<384x128xbf16, #tpu.memory_space<vmem>>, vector<384x128xbf16>
    %cst_14 = arith.constant dense<0.000000e+00> : vector<16x128xf32>
    %18 = tpu.matmul %16, %17, %cst_14 {dimension_numbers = #tpu.dot_dimension_numbers<[1], [0], [0], [1], [0, 0, 1, 1], [], []>} : vector<16x384xbf16>, vector<384x128xbf16>, vector<16x128xf32> -> vector<16x128xf32>
    %c0_15 = arith.constant 0 : index
    %c0_16 = arith.constant 0 : index
    %19 = vector.load %arg7[%c0_15, %c0_16] : memref<1x128xf32, #tpu.memory_space<vmem>>, vector<1x128xf32>
    %20 = vector.broadcast %19 : vector<1x128xf32> to vector<16x128xf32>
    %21 = arith.addf %18, %20 : vector<16x128xf32>
    %22 = math.tanh %21 : vector<16x128xf32>
    %cst_17 = arith.constant 2.000000e+00 : f32
    %23 = vector.broadcast %cst_17 : f32 to vector<16x128xf32>
    %24 = arith.mulf %22, %23 : vector<16x128xf32>
    %c0_18 = arith.constant 0 : index
    %c0_19 = arith.constant 0 : index
    %25 = vector.load %arg8[%c0_18, %c0_19] : memref<16x128xf32, #tpu.memory_space<vmem>>, vector<16x128xf32>
    tpu.vector_store %arg8[%c0_18, %c0_19], %24 {strides = array<i32>} : memref<16x128xf32, #tpu.memory_space<vmem>>, vector<16x128xf32>,
    return
  }
  func.func @transform_0(%arg0: i32) -> (i32, i32) {
    %c0_i32 = arith.constant 0 : i32
    %c0_i32_0 = arith.constant 0 : i32
    return %arg0, %c0_i32 : i32, i32
  }
  func.func @transform_1(%arg0: i32) -> (i32, i32) {
    %c0_i32 = arith.constant 0 : i32
    %c0_i32_0 = arith.constant 0 : i32
    %c0_i32_1 = arith.constant 0 : i32
    return %c0_i32, %c0_i32_0 : i32, i32
  }
  func.func @transform_2(%arg0: i32) -> (i32, i32) {
    %c0_i32 = arith.constant 0 : i32
    %c0_i32_0 = arith.constant 0 : i32
    %c0_i32_1 = arith.constant 0 : i32
    return %c0_i32, %c0_i32_0 : i32, i32
  }
  func.func @transform_3(%arg0: i32) -> (i32, i32) {
    %c0_i32 = arith.constant 0 : i32
    %c0_i32_0 = arith.constant 0 : i32
    %c0_i32_1 = arith.constant 0 : i32
    return %c0_i32, %c0_i32_0 : i32, i32
  }
  func.func @transform_4(%arg0: i32) -> (i32, i32) {
    %c0_i32 = arith.constant 0 : i32
    %c0_i32_0 = arith.constant 0 : i32
    %c0_i32_1 = arith.constant 0 : i32
    return %c0_i32, %c0_i32_0 : i32, i32
  }
  func.func @transform_5(%arg0: i32) -> (i32, i32) {
    %c0_i32 = arith.constant 0 : i32
    %c0_i32_0 = arith.constant 0 : i32
    %c0_i32_1 = arith.constant 0 : i32
    return %c0_i32, %c0_i32_0 : i32, i32
  }
  func.func @transform_6(%arg0: i32) -> (i32, i32) {
    %c0_i32 = arith.constant 0 : i32
    %c0_i32_0 = arith.constant 0 : i32
    %c0_i32_1 = arith.constant 0 : i32
    return %c0_i32, %c0_i32_0 : i32, i32
  }
  func.func @transform_7(%arg0: i32) -> (i32, i32) {
    %c0_i32 = arith.constant 0 : i32
    %c0_i32_0 = arith.constant 0 : i32
    return %arg0, %c0_i32 : i32, i32
  }
}

</mosaic_0001>

<llo_original>
// kernel: tpu_custom_call.1
$region0: #{tpu_custom_call.1}
  #allocation0 [shape = 'u32[]', space=smem, size = 0x4, offset = 0x4, fixed_abs, tag = 'smem constant byte address 0x4 - core index']
  #allocation1 [shape = 'u32[144,128]{1,0:T(1,128)}', space=vmem, size = 0x12000, scoped, tag = 'internal scratch']
  %s0 = inlined_call_operand.hbm [shape: bf16[16,128], index: 0, kind: input, shape index: {}]
  %s1 = inlined_call_operand.hbm [shape: bf16[128,512], index: 1, kind: input, shape index: {}]
  %s2 = inlined_call_operand.hbm [shape: f32[1,512], index: 2, kind: input, shape index: {}]
  %s3 = inlined_call_operand.hbm [shape: bf16[512,384], index: 3, kind: input, shape index: {}]
  %s4 = inlined_call_operand.vmem [shape: f32[1,384], index: 4, kind: input, shape index: {}]
  %s5 = inlined_call_operand.hbm [shape: bf16[384,128], index: 5, kind: input, shape index: {}]
  %s6 = inlined_call_operand.vmem [shape: f32[1,128], index: 6, kind: input, shape index: {}]
  %s7 = inlined_call_operand.hbm [shape: f32[16,128], index: 7, kind: output, shape index: {}]
  %s8 = sld [smem:[#allocation0]]
  $region58: #{tpu_custom_call.1} parent=0
    _
  %s10 = ssub.s32 1, %s8
  %s11 = scalar_select 0, %s10, %s8
  $region1: #{tpu_custom_call.1} parent=0
    #allocation2 [shape = 'u8[4096]{0}', space=vmem, size = 0x1000, scoped, tag = 'input window, operand 0, single buffered']
    #allocation3 [shape = 's32[1]{0}', space=sflag, size = 0x4, scoped, tag = 'scoped memory for tpu_custom_call.1']
    #allocation4 [shape = 's32[1]{0}', space=sflag, size = 0x4, scoped, tag = 'scoped memory for tpu_custom_call.1']
    #allocation5 [shape = 'u8[131072]{0}', space=vmem, size = 0x20000, scoped, tag = 'input window, operand 1, single buffered']
    #allocation6 [shape = 's32[1]{0}', space=sflag, size = 0x4, scoped, tag = 'scoped memory for tpu_custom_call.1']
    #allocation7 [shape = 'u8[2048]{0}', space=vmem, size = 0x800, scoped, tag = 'input window, operand 2, single buffered']
    #allocation8 [shape = 'u8[393216]{0}', space=vmem, size = 0x60000, scoped, tag = 'input window, operand 3, single buffered']
    #allocation9 [shape = 's32[1]{0}', space=sflag, size = 0x4, scoped, tag = 'scoped memory for tpu_custom_call.1']
    #allocation10 [shape = 'u8[98304]{0}', space=vmem, size = 0x18000, scoped, tag = 'input window, operand 5, single buffered']
    #allocation11 [shape = 'u8[8192]{0}', space=vmem, size = 0x2000, scoped, tag = 'output window, operand 0, single buffered']
    %12 = vsyncpa [#allocation3], 0
    %13 = vsyncpa [#allocation6], 0
    %14 = vsyncpa [#allocation9], 0
    %15 = vsyncpa [#allocation4], 0
    // Predicated region
    $region2: #{tpu_custom_call.1} parent=1 // pred_check
      _
    $region3: #{tpu_custom_call.1} parent=1 // pred_check_branch
      %17 = sbr.rel (0) target = $region5
    $region4: #{tpu_custom_call.1} parent=1 // pred_region
      %s19 = ssub.s32 128, 128
      %20 = vsyncadd [#allocation3], %s19
      %s21 = sshll.u32 [#allocation2], 4
      %s22 = int_to_ptr.vmem [resolvable:$true] %s21
      %27 = dma.hbm_to_vmem [thread:$0]  %s0, 128, %s22, [#allocation3], 64, 64, 4
    $region5: #{tpu_custom_call.1} parent=1 // pred_fallthru
      _
    // Predicated region
    $region6: #{tpu_custom_call.1} parent=1 // pred_check
      _
    $region7: #{tpu_custom_call.1} parent=1 // pred_check_branch
      %29 = sbr.rel (0) target = $region9
    $region8: #{tpu_custom_call.1} parent=1 // pred_region
      %s31 = ssub.s32 4096, 4096
      %32 = vsyncadd [#allocation6], %s31
      %s33 = sshll.u32 [#allocation5], 4
      %s34 = int_to_ptr.vmem [resolvable:$true] %s33
      %39 = dma.hbm_to_vmem [thread:$0]  %s1, 4096, %s34, [#allocation6], 256, 256, 16
    $region9: #{tpu_custom_call.1} parent=1 // pred_fallthru
      _
    // Predicated region
    $region10: #{tpu_custom_call.1} parent=1 // pred_check
      _
    $region11: #{tpu_custom_call.1} parent=1 // pred_check_branch
      %41 = sbr.rel (0) target = $region13
    $region12: #{tpu_custom_call.1} parent=1 // pred_region
      %s43 = ssub.s32 64, 64
      %44 = vsyncadd [#allocation6], %s43
      %s46 = sshll.u32 [#allocation7], 4
      %s47 = int_to_ptr.vmem [resolvable:$true] %s46
      %49 = dma.hbm_to_vmem [thread:$0]  %s2, 64, %s47, [#allocation6]
    $region13: #{tpu_custom_call.1} parent=1 // pred_fallthru
      _
    // Predicated region
    $region14: #{tpu_custom_call.1} parent=1 // pred_check
      _
    $region15: #{tpu_custom_call.1} parent=1 // pred_check_branch
      %51 = sbr.rel (0) target = $region17
    $region16: #{tpu_custom_call.1} parent=1 // pred_region
      %s53 = ssub.s32 12288, 12288
      %54 = vsyncadd [#allocation9], %s53
      %s55 = sshll.u32 [#allocation8], 4
      %s56 = int_to_ptr.vmem [resolvable:$true] %s55
      %61 = dma.hbm_to_vmem [thread:$0]  %s3, 12288, %s56, [#allocation9], 192, 192, 12
    $region17: #{tpu_custom_call.1} parent=1 // pred_fallthru
      _
    // Predicated region
    $region18: #{tpu_custom_call.1} parent=1 // pred_check
      _
    $region19: #{tpu_custom_call.1} parent=1 // pred_check_branch
      %63 = sbr.rel (0) target = $region21
    $region20: #{tpu_custom_call.1} parent=1 // pred_region
      _
    $region21: #{tpu_custom_call.1} parent=1 // pred_fallthru
      _
    // Predicated region
    $region22: #{tpu_custom_call.1} parent=1 // pred_check
      _
    $region23: #{tpu_custom_call.1} parent=1 // pred_check_branch
      %65 = sbr.rel (0) target = $region25
    $region24: #{tpu_custom_call.1} parent=1 // pred_region
      %s67 = ssub.s32 3072, 3072
      %68 = vsyncadd [#allocation9], %s67
      %s69 = sshll.u32 [#allocation10], 4
      %s70 = int_to_ptr.vmem [resolvable:$true] %s69
      %75 = dma.hbm_to_vmem [thread:$0]  %s5, 3072, %s70, [#allocation9], 64, 64, 4
    $region25: #{tpu_custom_call.1} parent=1 // pred_fallthru
      _
    // Predicated region
    $region26: #{tpu_custom_call.1} parent=1 // pred_check
      _
    $region27: #{tpu_custom_call.1} parent=1 // pred_check_branch
      %77 = sbr.rel (0) target = $region29
    $region28: #{tpu_custom_call.1} parent=1 // pred_region
      _
    $region29: #{tpu_custom_call.1} parent=1 // pred_fallthru
      _
    // Predicated region
    $region30: #{tpu_custom_call.1} parent=1 // pred_check
      _
    $region31: #{tpu_custom_call.1} parent=1 // pred_check_branch
      %79 = sbr.rel (0) target = $region33
    $region32: #{tpu_custom_call.1} parent=1 // pred_region
      %80 = dma.done [#allocation3], 128
    $region33: #{tpu_custom_call.1} parent=1 // pred_fallthru
      _
    // Predicated region
    $region34: #{tpu_custom_call.1} parent=1 // pred_check
      _
    $region35: #{tpu_custom_call.1} parent=1 // pred_check_branch
      %82 = sbr.rel (0) target = $region37
    $region36: #{tpu_custom_call.1} parent=1 // pred_region
      %83 = dma.done [#allocation6], 4096
    $region37: #{tpu_custom_call.1} parent=1 // pred_fallthru
      _
    // Predicated region
    $region38: #{tpu_custom_call.1} parent=1 // pred_check
      _
    $region39: #{tpu_custom_call.1} parent=1 // pred_check_branch
      %85 = sbr.rel (0) target = $region41
    $region40: #{tpu_custom_call.1} parent=1 // pred_region
      %86 = dma.done [#allocation6], 64
    $region41: #{tpu_custom_call.1} parent=1 // pred_fallthru
      _
    // Predicated region
    $region42: #{tpu_custom_call.1} parent=1 // pred_check
      _
    $region43: #{tpu_custom_call.1} parent=1 // pred_check_branch
      %88 = sbr.rel (0) target = $region45
    $region44: #{tpu_custom_call.1} parent=1 // pred_region
      %89 = dma.done [#allocation9], 12288
    $region45: #{tpu_custom_call.1} parent=1 // pred_fallthru
      _
    // Predicated region
    $region46: #{tpu_custom_call.1} parent=1 // pred_check
      _
    $region47: #{tpu_custom_call.1} parent=1 // pred_check_branch
      %91 = sbr.rel (0) target = $region49
    $region48: #{tpu_custom_call.1} parent=1 // pred_region
      %92 = dma.done [#allocation9], 3072
    $region49: #{tpu_custom_call.1} parent=1 // pred_fallthru
      _
    %v94 = vld [vmem:[#allocation2] sm:$0xf]
    %v95 = vld [vmem:[#allocation2 + $0x4] sm:$0xf]
    %v96 = vld [vmem:[#allocation5] sm:$0xff]
    %v97 = vld [vmem:[#allocation5 + $0x8] sm:$0xff]
    %v98 = vld [vmem:[#allocation5 + $0x10] sm:$0xff]
    %v99 = vld [vmem:[#allocation5 + $0x18] sm:$0xff]
    %v100 = vld [vmem:[#allocation5 + $0x20] sm:$0xff]
    %v101 = vld [vmem:[#allocation5 + $0x28] sm:$0xff]
    %v102 = vld [vmem:[#allocation5 + $0x30] sm:$0xff]
    %v103 = vld [vmem:[#allocation5 + $0x38] sm:$0xff]
    %v104 = vld [vmem:[#allocation5 + $0x40] sm:$0xff]
    %v105 = vld [vmem:[#allocation5 + $0x48] sm:$0xff]
    %v106 = vld [vmem:[#allocation5 + $0x50] sm:$0xff]
    %v107 = vld [vmem:[#allocation5 + $0x58] sm:$0xff]
    %v108 = vld [vmem:[#allocation5 + $0x60] sm:$0xff]
    %v109 = vld [vmem:[#allocation5 + $0x68] sm:$0xff]
    %v110 = vld [vmem:[#allocation5 + $0x70] sm:$0xff]
    %v111 = vld [vmem:[#allocation5 + $0x78] sm:$0xff]
    %v112 = vld [vmem:[#allocation5 + $0x80] sm:$0xff]
    %v113 = vld [vmem:[#allocation5 + $0x88] sm:$0xff]
    %v114 = vld [vmem:[#allocation5 + $0x90] sm:$0xff]
    %v115 = vld [vmem:[#allocation5 + $0x98] sm:$0xff]
    %v116 = vld [vmem:[#allocation5 + $0xa0] sm:$0xff]
    %v117 = vld [vmem:[#allocation5 + $0xa8] sm:$0xff]
    %v118 = vld [vmem:[#allocation5 + $0xb0] sm:$0xff]
    %v119 = vld [vmem:[#allocation5 + $0xb8] sm:$0xff]
    %v120 = vld [vmem:[#allocation5 + $0xc0] sm:$0xff]
    %v121 = vld [vmem:[#allocation5 + $0xc8] sm:$0xff]
    %v122 = vld [vmem:[#allocation5 + $0xd0] sm:$0xff]
    %v123 = vld [vmem:[#allocation5 + $0xd8] sm:$0xff]
    %v124 = vld [vmem:[#allocation5 + $0xe0] sm:$0xff]
    %v125 = vld [vmem:[#allocation5 + $0xe8] sm:$0xff]
    %v126 = vld [vmem:[#allocation5 + $0xf0] sm:$0xff]
    %v127 = vld [vmem:[#allocation5 + $0xf8] sm:$0xff]
    %v128 = vld [vmem:[#allocation7] sm:$0xf]
    %v130 = vlaneseq
    %v131 = vshrl.u32 %v130, 7
    %v132 = vsub.s32 0, %v131
    %v133 = vrot.slane %v128, %v132
    %v134 = vlaneseq
    %v135 = vshrl.u32 %v134, 7
    %v136 = vsub.s32 1, %v135
    %v137 = vrot.slane %v128, %v136
    %v138 = vlaneseq
    %v139 = vshrl.u32 %v138, 7
    %v140 = vsub.s32 2, %v139
    %v141 = vrot.slane %v128, %v140
    %v142 = vlaneseq
    %v143 = vshrl.u32 %v142, 7
    %v144 = vsub.s32 3, %v143
    %v145 = vrot.slane %v128, %v144
    %v152 = vunpack.c.l.b16 %v94
    %v153 = vunpack.c.l.b16 %v95
    %v154 = vpack.c.b16 %v153, %v152
    %v188 = vunpack.c.l.b16 %v96
    %v189 = vunpack.c.h.b16 %v96
    %v190 = vunpack.c.l.b16 %v97
    %v191 = vunpack.c.h.b16 %v97
    %v192 = vunpack.c.l.b16 %v98
    %v193 = vunpack.c.h.b16 %v98
    %v194 = vunpack.c.l.b16 %v99
    %v195 = vunpack.c.h.b16 %v99
    %v196 = vunpack.c.l.b16 %v100
    %v197 = vunpack.c.h.b16 %v100
    %v198 = vunpack.c.l.b16 %v101
    %v199 = vunpack.c.h.b16 %v101
    %v200 = vunpack.c.l.b16 %v102
    %v201 = vunpack.c.h.b16 %v102
    %v202 = vunpack.c.l.b16 %v103
    %v203 = vunpack.c.h.b16 %v103
    %v204 = vunpack.c.l.b16 %v104
    %v205 = vunpack.c.h.b16 %v104
    %v206 = vunpack.c.l.b16 %v105
    %v207 = vunpack.c.h.b16 %v105
    %v208 = vunpack.c.l.b16 %v106
    %v209 = vunpack.c.h.b16 %v106
    %v210 = vunpack.c.l.b16 %v107
    %v211 = vunpack.c.h.b16 %v107
    %v212 = vunpack.c.l.b16 %v108
    %v213 = vunpack.c.h.b16 %v108
    %v214 = vunpack.c.l.b16 %v109
    %v215 = vunpack.c.h.b16 %v109
    %v216 = vunpack.c.l.b16 %v110
    %v217 = vunpack.c.h.b16 %v110
    %v218 = vunpack.c.l.b16 %v111
    %v219 = vunpack.c.h.b16 %v111
    %v220 = vunpack.c.l.b16 %v112
    %v221 = vunpack.c.h.b16 %v112
    %v222 = vunpack.c.l.b16 %v113
    %v223 = vunpack.c.h.b16 %v113
    %v224 = vunpack.c.l.b16 %v114
    %v225 = vunpack.c.h.b16 %v114
    %v226 = vunpack.c.l.b16 %v115
    %v227 = vunpack.c.h.b16 %v115
    %v228 = vunpack.c.l.b16 %v116
    %v229 = vunpack.c.h.b16 %v116
    %v230 = vunpack.c.l.b16 %v117
    %v231 = vunpack.c.h.b16 %v117
    %v232 = vunpack.c.l.b16 %v118
    %v233 = vunpack.c.h.b16 %v118
    %v234 = vunpack.c.l.b16 %v119
    %v235 = vunpack.c.h.b16 %v119
    %v236 = vunpack.c.l.b16 %v120
    %v237 = vunpack.c.h.b16 %v120
    %v238 = vunpack.c.l.b16 %v121
    %v239 = vunpack.c.h.b16 %v121
    %v240 = vunpack.c.l.b16 %v122
    %v241 = vunpack.c.h.b16 %v122
    %v242 = vunpack.c.l.b16 %v123
    %v243 = vunpack.c.h.b16 %v123
    %v244 = vunpack.c.l.b16 %v124
    %v245 = vunpack.c.h.b16 %v124
    %v246 = vunpack.c.l.b16 %v125
    %v247 = vunpack.c.h.b16 %v125
    %v248 = vunpack.c.l.b16 %v126
    %v249 = vunpack.c.h.b16 %v126
    %v250 = vunpack.c.l.b16 %v127
    %v251 = vunpack.c.h.b16 %v127
    %v252 = vpack.c.b16 %v192, %v188
    %v253 = vpack.c.b16 %v193, %v189
    %v254 = vpack.c.b16 %v194, %v190
    %v255 = vpack.c.b16 %v195, %v191
    %v256 = vpack.c.b16 %v200, %v196
    %v257 = vpack.c.b16 %v201, %v197
    %v258 = vpack.c.b16 %v202, %v198
    %v259 = vpack.c.b16 %v203, %v199
    %v260 = vpack.c.b16 %v208, %v204
    %v261 = vpack.c.b16 %v209, %v205
    %v262 = vpack.c.b16 %v210, %v206
    %v263 = vpack.c.b16 %v211, %v207
    %v264 = vpack.c.b16 %v216, %v212
    %v265 = vpack.c.b16 %v217, %v213
    %v266 = vpack.c.b16 %v218, %v214
    %v267 = vpack.c.b16 %v219, %v215
    %v268 = vpack.c.b16 %v224, %v220
    %v269 = vpack.c.b16 %v225, %v221
    %v270 = vpack.c.b16 %v226, %v222
    %v271 = vpack.c.b16 %v227, %v223
    %v272 = vpack.c.b16 %v232, %v228
    %v273 = vpack.c.b16 %v233, %v229
    %v274 = vpack.c.b16 %v234, %v230
    %v275 = vpack.c.b16 %v235, %v231
    %v276 = vpack.c.b16 %v240, %v236
    %v277 = vpack.c.b16 %v241, %v237
    %v278 = vpack.c.b16 %v242, %v238
    %v279 = vpack.c.b16 %v243, %v239
    %v280 = vpack.c.b16 %v248, %v244
    %v281 = vpack.c.b16 %v249, %v245
    %v282 = vpack.c.b16 %v250, %v246
    %v283 = vpack.c.b16 %v251, %v247
    %316 = vmatprep.subr.bf16.mxu0 %v281
    %317 = vmatpush1.bf16.msra.mxu0 %v280
    %318 = vmatprep.subr.bf16.mxu0 %v277
    %319 = vmatpush1.bf16.msra.mxu0 %v276
    %320 = vmatprep.subr.bf16.mxu0 %v273
    %321 = vmatpush1.bf16.msra.mxu0 %v272
    %322 = vmatprep.subr.bf16.mxu0 %v269
    %323 = vmatpush1.bf16.msra.mxu0 %v268
    %324 = vmatprep.subr.bf16.mxu0 %v265
    %325 = vmatpush1.bf16.msra.mxu0 %v264
    %326 = vmatprep.subr.bf16.mxu0 %v261
    %327 = vmatpush1.bf16.msra.mxu0 %v260
    %328 = vmatprep.subr.bf16.mxu0 %v257
    %329 = vmatpush1.bf16.msra.mxu0 %v256
    %330 = vmatprep.subr.bf16.mxu0 %v253
    %331 = vmatpush1.bf16.msra.mxu0 %v252
    %332 = vmatprep.subr.bf16.mxu0 0
    %333 = vmatpush2.bf16.msra.mxu0 0
    %334 = vmatprep.subr.bf16.mxu0 0
    %335 = vmatpush2.bf16.msra.mxu0 0
    %336 = vmatprep.subr.bf16.mxu0 0
    %337 = vmatpush2.bf16.msra.mxu0 0
    %338 = vmatprep.subr.bf16.mxu0 0
    %339 = vmatpush2.bf16.msra.mxu0 0
    %340 = vmatprep.subr.bf16.mxu0 0
    %341 = vmatpush2.bf16.msra.mxu0 0
    %342 = vmatprep.subr.bf16.mxu0 0
    %343 = vmatpush2.bf16.msra.mxu0 0
    %344 = vmatprep.subr.bf16.mxu0 0
    %345 = vmatpush2.bf16.msra.mxu0 0
    %346 = vmatprep.subr.bf16.mxu0 0
    %347 = vmatpush2.bf16.msra.mxu0 0
    %348 = vmatprep.mubr.bf16.mxu0 0
    %349 = vmatmul.mubr.bf16.gmra.mxu0 %v154
    %v350 = vpop.f32.mrf.mxu0
    %v351 = vadd.f32 %v133, %v350
    %v352 = vpop.f32.mrf.mxu0
    %v353 = vadd.f32 %v137, %v352
    %v354 = vpop.f32.mrf.mxu0
    %v355 = vadd.f32 %v133, %v354
    %v356 = vpop.f32.mrf.mxu0
    %v357 = vadd.f32 %v137, %v356
    %358 = vdwg.mxu0
    %359 = vmatprep.subr.bf16.mxu0 %v283
    %360 = vmatpush1.bf16.msra.mxu0 %v282
    %361 = vmatprep.subr.bf16.mxu0 %v279
    %362 = vmatpush1.bf16.msra.mxu0 %v278
    %363 = vmatprep.subr.bf16.mxu0 %v275
    %364 = vmatpush1.bf16.msra.mxu0 %v274
    %365 = vmatprep.subr.bf16.mxu0 %v271
    %366 = vmatpush1.bf16.msra.mxu0 %v270
    %367 = vmatprep.subr.bf16.mxu0 %v267
    %368 = vmatpush1.bf16.msra.mxu0 %v266
    %369 = vmatprep.subr.bf16.mxu0 %v263
    %370 = vmatpush1.bf16.msra.mxu0 %v262
    %371 = vmatprep.subr.bf16.mxu0 %v259
    %372 = vmatpush1.bf16.msra.mxu0 %v258
    %373 = vmatprep.subr.bf16.mxu0 %v255
    %374 = vmatpush1.bf16.msra.mxu0 %v254
    %375 = vmatprep.subr.bf16.mxu0 0
    %376 = vmatpush2.bf16.msra.mxu0 0
    %377 = vmatprep.subr.bf16.mxu0 0
    %378 = vmatpush2.bf16.msra.mxu0 0
    %379 = vmatprep.subr.bf16.mxu0 0
    %380 = vmatpush2.bf16.msra.mxu0 0
    %381 = vmatprep.subr.bf16.mxu0 0
    %382 = vmatpush2.bf16.msra.mxu0 0
    %383 = vmatprep.subr.bf16.mxu0 0
    %384 = vmatpush2.bf16.msra.mxu0 0
    %385 = vmatprep.subr.bf16.mxu0 0
    %386 = vmatpush2.bf16.msra.mxu0 0
    %387 = vmatprep.subr.bf16.mxu0 0
    %388 = vmatpush2.bf16.msra.mxu0 0
    %389 = vmatprep.subr.bf16.mxu0 0
    %390 = vmatpush2.bf16.msra.mxu0 0
    %391 = vmatprep.mubr.bf16.mxu0 0
    %392 = vmatmul.mubr.bf16.gmra.mxu0 %v154
    %v393 = vpop.f32.mrf.mxu0
    %v394 = vadd.f32 %v141, %v393
    %v395 = vpop.f32.mrf.mxu0
    %v396 = vadd.f32 %v145, %v395
    %v397 = vpop.f32.mrf.mxu0
    %v398 = vadd.f32 %v141, %v397
    %v399 = vpop.f32.mrf.mxu0
    %v400 = vadd.f32 %v145, %v399
    %401 = vdwg.mxu0
    %v402 = vmax.f32 %v351, 0.0
    %v403 = vmax.f32 %v353, 0.0
    %v404 = vmax.f32 %v394, 0.0
    %v405 = vmax.f32 %v396, 0.0
    %v406 = vmax.f32 %v355, 0.0
    %v407 = vmax.f32 %v357, 0.0
    %v408 = vmax.f32 %v398, 0.0
    %v409 = vmax.f32 %v400, 0.0
    %v410 = vpack.c.bf16 %v406, %v402
    %v411 = vpack.c.bf16 %v407, %v403
    %v412 = vpack.c.bf16 %v408, %v404
    %v413 = vpack.c.bf16 %v409, %v405
    %v414 = vld [vmem:[#allocation8] sm:$0xff]
    %v415 = vld [vmem:[#allocation8 + $0x8] sm:$0xf]
    %v416 = vld [vmem:[#allocation8 + $0xc] sm:$0xff]
    %v417 = vld [vmem:[#allocation8 + $0x14] sm:$0xf]
    %v418 = vld [vmem:[#allocation8 + $0x18] sm:$0xff]
    %v419 = vld [vmem:[#allocation8 + $0x20] sm:$0xf]
    %v420 = vld [vmem:[#allocation8 + $0x24] sm:$0xff]
    %v421 = vld [vmem:[#allocation8 + $0x2c] sm:$0xf]
    %v422 = vld [vmem:[#allocation8 + $0x30] sm:$0xff]
    %v423 = vld [vmem:[#allocation8 + $0x38] sm:$0xf]
    %v424 = vld [vmem:[#allocation8 + $0x3c] sm:$0xff]
    %v425 = vld [vmem:[#allocation8 + $0x44] sm:$0xf]
    %v426 = vld [vmem:[#allocation8 + $0x48] sm:$0xff]
    %v427 = vld [vmem:[#allocation8 + $0x50] sm:$0xf]
    %v428 = vld [vmem:[#allocation8 + $0x54] sm:$0xff]
    %v429 = vld [vmem:[#allocation8 + $0x5c] sm:$0xf]
    %v430 = vld [vmem:[#allocation8 + $0x60] sm:$0xff]
    %v431 = vld [vmem:[#allocation8 + $0x68] sm:$0xf]
    %v432 = vld [vmem:[#allocation8 + $0x6c] sm:$0xff]
    %v433 = vld [vmem:[#allocation8 + $0x74] sm:$0xf]
    %v434 = vld [vmem:[#allocation8 + $0x78] sm:$0xff]
    %v435 = vld [vmem:[#allocation8 + $0x80] sm:$0xf]
    %v436 = vld [vmem:[#allocation8 + $0x84] sm:$0xff]
    %v437 = vld [vmem:[#allocation8 + $0x8c] sm:$0xf]
    %v438 = vld [vmem:[#allocation8 + $0x90] sm:$0xff]
    %v439 = vld [vmem:[#allocation8 + $0x98] sm:$0xf]
    %v440 = vld [vmem:[#allocation8 + $0x9c] sm:$0xff]
    %v441 = vld [vmem:[#allocation8 + $0xa4] sm:$0xf]
    %v442 = vld [vmem:[#allocation8 + $0xa8] sm:$0xff]
    %v443 = vld [vmem:[#allocation8 + $0xb0] sm:$0xf]
    %v444 = vld [vmem:[#allocation8 + $0xb4] sm:$0xff]
    %v445 = vld [vmem:[#allocation8 + $0xbc] sm:$0xf]
    %v446 = vld [vmem:[#allocation8 + $0xc0] sm:$0xff]
    %v447 = vld [vmem:[#allocation8 + $0xc8] sm:$0xf]
    %v448 = vld [vmem:[#allocation8 + $0xcc] sm:$0xff]
    %v449 = vld [vmem:[#allocation8 + $0xd4] sm:$0xf]
    %v450 = vld [vmem:[#allocation8 + $0xd8] sm:$0xff]
    %v451 = vld [vmem:[#allocation8 + $0xe0] sm:$0xf]
    %v452 = vld [vmem:[#allocation8 + $0xe4] sm:$0xff]
    %v453 = vld [vmem:[#allocation8 + $0xec] sm:$0xf]
    %v454 = vld [vmem:[#allocation8 + $0xf0] sm:$0xff]
    %v455 = vld [vmem:[#allocation8 + $0xf8] sm:$0xf]
    %v456 = vld [vmem:[#allocation8 + $0xfc] sm:$0xff]
    %v457 = vld [vmem:[#allocation8 + $0x104] sm:$0xf]
    %v458 = vld [vmem:[#allocation8 + $0x108] sm:$0xff]
    %v459 = vld [vmem:[#allocation8 + $0x110] sm:$0xf]
    %v460 = vld [vmem:[#allocation8 + $0x114] sm:$0xff]
    %v461 = vld [vmem:[#allocation8 + $0x11c] sm:$0xf]
    %v462 = vld [vmem:[#allocation8 + $0x120] sm:$0xff]
    %v463 = vld [vmem:[#allocation8 + $0x128] sm:$0xf]
    %v464 = vld [vmem:[#allocation8 + $0x12c] sm:$0xff]
    %v465 = vld [vmem:[#allocation8 + $0x134] sm:$0xf]
    %v466 = vld [vmem:[#allocation8 + $0x138] sm:$0xff]
    %v467 = vld [vmem:[#allocation8 + $0x140] sm:$0xf]
    %v468 = vld [vmem:[#allocation8 + $0x144] sm:$0xff]
    %v469 = vld [vmem:[#allocation8 + $0x14c] sm:$0xf]
    %v470 = vld [vmem:[#allocation8 + $0x150] sm:$0xff]
    %v471 = vld [vmem:[#allocation8 + $0x158] sm:$0xf]
    %v472 = vld [vmem:[#allocation8 + $0x15c] sm:$0xff]
    %v473 = vld [vmem:[#allocation8 + $0x164] sm:$0xf]
    %v474 = vld [vmem:[#allocation8 + $0x168] sm:$0xff]
    %v475 = vld [vmem:[#allocation8 + $0x170] sm:$0xf]
    %v476 = vld [vmem:[#allocation8 + $0x174] sm:$0xff]
    %v477 = vld [vmem:[#allocation8 + $0x17c] sm:$0xf]
    %v478 = vld [vmem:[#allocation8 + $0x180] sm:$0xff]
    %v479 = vld [vmem:[#allocation8 + $0x188] sm:$0xf]
    %v480 = vld [vmem:[#allocation8 + $0x18c] sm:$0xff]
    %v481 = vld [vmem:[#allocation8 + $0x194] sm:$0xf]
    %v482 = vld [vmem:[#allocation8 + $0x198] sm:$0xff]
    %v483 = vld [vmem:[#allocation8 + $0x1a0] sm:$0xf]
    %v484 = vld [vmem:[#allocation8 + $0x1a4] sm:$0xff]
    %v485 = vld [vmem:[#allocation8 + $0x1ac] sm:$0xf]
    %v486 = vld [vmem:[#allocation8 + $0x1b0] sm:$0xff]
    %v487 = vld [vmem:[#allocation8 + $0x1b8] sm:$0xf]
    %v488 = vld [vmem:[#allocation8 + $0x1bc] sm:$0xff]
    %v489 = vld [vmem:[#allocation8 + $0x1c4] sm:$0xf]
    %v490 = vld [vmem:[#allocation8 + $0x1c8] sm:$0xff]
    %v491 = vld [vmem:[#allocation8 + $0x1d0] sm:$0xf]
    %v492 = vld [vmem:[#allocation8 + $0x1d4] sm:$0xff]
    %v493 = vld [vmem:[#allocation8 + $0x1dc] sm:$0xf]
    %v494 = vld [vmem:[#allocation8 + $0x1e0] sm:$0xff]
    %v495 = vld [vmem:[#allocation8 + $0x1e8] sm:$0xf]
    %v496 = vld [vmem:[#allocation8 + $0x1ec] sm:$0xff]
    %v497 = vld [vmem:[#allocation8 + $0x1f4] sm:$0xf]
    %v498 = vld [vmem:[#allocation8 + $0x1f8] sm:$0xff]
    %v499 = vld [vmem:[#allocation8 + $0x200] sm:$0xf]
    %v500 = vld [vmem:[#allocation8 + $0x204] sm:$0xff]
    %v501 = vld [vmem:[#allocation8 + $0x20c] sm:$0xf]
    %v502 = vld [vmem:[#allocation8 + $0x210] sm:$0xff]
    %v503 = vld [vmem:[#allocation8 + $0x218] sm:$0xf]
    %v504 = vld [vmem:[#allocation8 + $0x21c] sm:$0xff]
    %v505 = vld [vmem:[#allocation8 + $0x224] sm:$0xf]
    %v506 = vld [vmem:[#allocation8 + $0x228] sm:$0xff]
    %v507 = vld [vmem:[#allocation8 + $0x230] sm:$0xf]
    %v508 = vld [vmem:[#allocation8 + $0x234] sm:$0xff]
    %v509 = vld [vmem:[#allocation8 + $0x23c] sm:$0xf]
    %v510 = vld [vmem:[#allocation8 + $0x240] sm:$0xff]
    %v511 = vld [vmem:[#allocation8 + $0x248] sm:$0xf]
    %v512 = vld [vmem:[#allocation8 + $0x24c] sm:$0xff]
    %v513 = vld [vmem:[#allocation8 + $0x254] sm:$0xf]
    %v514 = vld [vmem:[#allocation8 + $0x258] sm:$0xff]
    %v515 = vld [vmem:[#allocation8 + $0x260] sm:$0xf]
    %v516 = vld [vmem:[#allocation8 + $0x264] sm:$0xff]
    %v517 = vld [vmem:[#allocation8 + $0x26c] sm:$0xf]
    %v518 = vld [vmem:[#allocation8 + $0x270] sm:$0xff]
    %v519 = vld [vmem:[#allocation8 + $0x278] sm:$0xf]
    %v520 = vld [vmem:[#allocation8 + $0x27c] sm:$0xff]
    %v521 = vld [vmem:[#allocation8 + $0x284] sm:$0xf]
    %v522 = vld [vmem:[#allocation8 + $0x288] sm:$0xff]
    %v523 = vld [vmem:[#allocation8 + $0x290] sm:$0xf]
    %v524 = vld [vmem:[#allocation8 + $0x294] sm:$0xff]
    %v525 = vld [vmem:[#allocation8 + $0x29c] sm:$0xf]
    %v526 = vld [vmem:[#allocation8 + $0x2a0] sm:$0xff]
    %v527 = vld [vmem:[#allocation8 + $0x2a8] sm:$0xf]
    %v528 = vld [vmem:[#allocation8 + $0x2ac] sm:$0xff]
    %v529 = vld [vmem:[#allocation8 + $0x2b4] sm:$0xf]
    %v530 = vld [vmem:[#allocation8 + $0x2b8] sm:$0xff]
    %v531 = vld [vmem:[#allocation8 + $0x2c0] sm:$0xf]
    %v532 = vld [vmem:[#allocation8 + $0x2c4] sm:$0xff]
    %v533 = vld [vmem:[#allocation8 + $0x2cc] sm:$0xf]
    %v534 = vld [vmem:[#allocation8 + $0x2d0] sm:$0xff]
    %v535 = vld [vmem:[#allocation8 + $0x2d8] sm:$0xf]
    %v536 = vld [vmem:[#allocation8 + $0x2dc] sm:$0xff]
    %v537 = vld [vmem:[#allocation8 + $0x2e4] sm:$0xf]
    %v538 = vld [vmem:[#allocation8 + $0x2e8] sm:$0xff]
    %v539 = vld [vmem:[#allocation8 + $0x2f0] sm:$0xf]
    %v540 = vld [vmem:[#allocation8 + $0x2f4] sm:$0xff]
    %v541 = vld [vmem:[#allocation8 + $0x2fc] sm:$0xf]
    %v542 = vld [vmem:[%s4] sm:$0x7]
    %v544 = vlaneseq
    %v545 = vshrl.u32 %v544, 7
    %v546 = vsub.s32 0, %v545
    %v547 = vrot.slane %v542, %v546
    %v548 = vlaneseq
    %v549 = vshrl.u32 %v548, 7
    %v550 = vsub.s32 1, %v549
    %v551 = vrot.slane %v542, %v550
    %v552 = vlaneseq
    %v553 = vshrl.u32 %v552, 7
    %v554 = vsub.s32 2, %v553
    %v555 = vrot.slane %v542, %v554
    %v687 = vunpack.c.l.b16 %v414
    %v688 = vunpack.c.h.b16 %v414
    %v689 = vunpack.c.l.b16 %v415
    %v690 = vunpack.c.l.b16 %v416
    %v691 = vunpack.c.h.b16 %v416
    %v692 = vunpack.c.l.b16 %v417
    %v693 = vunpack.c.l.b16 %v418
    %v694 = vunpack.c.h.b16 %v418
    %v695 = vunpack.c.l.b16 %v419
    %v696 = vunpack.c.l.b16 %v420
    %v697 = vunpack.c.h.b16 %v420
    %v698 = vunpack.c.l.b16 %v421
    %v699 = vunpack.c.l.b16 %v422
    %v700 = vunpack.c.h.b16 %v422
    %v701 = vunpack.c.l.b16 %v423
    %v702 = vunpack.c.l.b16 %v424
    %v703 = vunpack.c.h.b16 %v424
    %v704 = vunpack.c.l.b16 %v425
    %v705 = vunpack.c.l.b16 %v426
    %v706 = vunpack.c.h.b16 %v426
    %v707 = vunpack.c.l.b16 %v427
    %v708 = vunpack.c.l.b16 %v428
    %v709 = vunpack.c.h.b16 %v428
    %v710 = vunpack.c.l.b16 %v429
    %v711 = vunpack.c.l.b16 %v430
    %v712 = vunpack.c.h.b16 %v430
    %v713 = vunpack.c.l.b16 %v431
    %v714 = vunpack.c.l.b16 %v432
    %v715 = vunpack.c.h.b16 %v432
    %v716 = vunpack.c.l.b16 %v433
    %v717 = vunpack.c.l.b16 %v434
    %v718 = vunpack.c.h.b16 %v434
    %v719 = vunpack.c.l.b16 %v435
    %v720 = vunpack.c.l.b16 %v436
    %v721 = vunpack.c.h.b16 %v436
    %v722 = vunpack.c.l.b16 %v437
    %v723 = vunpack.c.l.b16 %v438
    %v724 = vunpack.c.h.b16 %v438
    %v725 = vunpack.c.l.b16 %v439
    %v726 = vunpack.c.l.b16 %v440
    %v727 = vunpack.c.h.b16 %v440
    %v728 = vunpack.c.l.b16 %v441
    %v729 = vunpack.c.l.b16 %v442
    %v730 = vunpack.c.h.b16 %v442
    %v731 = vunpack.c.l.b16 %v443
    %v732 = vunpack.c.l.b16 %v444
    %v733 = vunpack.c.h.b16 %v444
    %v734 = vunpack.c.l.b16 %v445
    %v735 = vunpack.c.l.b16 %v446
    %v736 = vunpack.c.h.b16 %v446
    %v737 = vunpack.c.l.b16 %v447
    %v738 = vunpack.c.l.b16 %v448
    %v739 = vunpack.c.h.b16 %v448
    %v740 = vunpack.c.l.b16 %v449
    %v741 = vunpack.c.l.b16 %v450
    %v742 = vunpack.c.h.b16 %v450
    %v743 = vunpack.c.l.b16 %v451
    %v744 = vunpack.c.l.b16 %v452
    %v745 = vunpack.c.h.b16 %v452
    %v746 = vunpack.c.l.b16 %v453
    %v747 = vunpack.c.l.b16 %v454
    %v748 = vunpack.c.h.b16 %v454
    %v749 = vunpack.c.l.b16 %v455
    %v750 = vunpack.c.l.b16 %v456
    %v751 = vunpack.c.h.b16 %v456
    %v752 = vunpack.c.l.b16 %v457
    %v753 = vunpack.c.l.b16 %v458
    %v754 = vunpack.c.h.b16 %v458
    %v755 = vunpack.c.l.b16 %v459
    %v756 = vunpack.c.l.b16 %v460
    %v757 = vunpack.c.h.b16 %v460
    %v758 = vunpack.c.l.b16 %v461
    %v759 = vunpack.c.l.b16 %v462
    %v760 = vunpack.c.h.b16 %v462
    %v761 = vunpack.c.l.b16 %v463
    %v762 = vunpack.c.l.b16 %v464
    %v763 = vunpack.c.h.b16 %v464
    %v764 = vunpack.c.l.b16 %v465
    %v765 = vunpack.c.l.b16 %v466
    %v766 = vunpack.c.h.b16 %v466
    %v767 = vunpack.c.l.b16 %v467
    %v768 = vunpack.c.l.b16 %v468
    %v769 = vunpack.c.h.b16 %v468
    %v770 = vunpack.c.l.b16 %v469
    %v771 = vunpack.c.l.b16 %v470
    %v772 = vunpack.c.h.b16 %v470
    %v773 = vunpack.c.l.b16 %v471
    %v774 = vunpack.c.l.b16 %v472
    %v775 = vunpack.c.h.b16 %v472
    %v776 = vunpack.c.l.b16 %v473
    %v777 = vunpack.c.l.b16 %v474
    %v778 = vunpack.c.h.b16 %v474
    %v779 = vunpack.c.l.b16 %v475
    %v780 = vunpack.c.l.b16 %v476
    %v781 = vunpack.c.h.b16 %v476
    %v782 = vunpack.c.l.b16 %v477
    %v783 = vunpack.c.l.b16 %v478
    %v784 = vunpack.c.h.b16 %v478
    %v785 = vunpack.c.l.b16 %v479
    %v786 = vunpack.c.l.b16 %v480
    %v787 = vunpack.c.h.b16 %v480
    %v788 = vunpack.c.l.b16 %v481
    %v789 = vunpack.c.l.b16 %v482
    %v790 = vunpack.c.h.b16 %v482
    %v791 = vunpack.c.l.b16 %v483
    %v792 = vunpack.c.l.b16 %v484
    %v793 = vunpack.c.h.b16 %v484
    %v794 = vunpack.c.l.b16 %v485
    %v795 = vunpack.c.l.b16 %v486
    %v796 = vunpack.c.h.b16 %v486
    %v797 = vunpack.c.l.b16 %v487
    %v798 = vunpack.c.l.b16 %v488
    %v799 = vunpack.c.h.b16 %v488
    %v800 = vunpack.c.l.b16 %v489
    %v801 = vunpack.c.l.b16 %v490
    %v802 = vunpack.c.h.b16 %v490
    %v803 = vunpack.c.l.b16 %v491
    %v804 = vunpack.c.l.b16 %v492
    %v805 = vunpack.c.h.b16 %v492
    %v806 = vunpack.c.l.b16 %v493
    %v807 = vunpack.c.l.b16 %v494
    %v808 = vunpack.c.h.b16 %v494
    %v809 = vunpack.c.l.b16 %v495
    %v810 = vunpack.c.l.b16 %v496
    %v811 = vunpack.c.h.b16 %v496
    %v812 = vunpack.c.l.b16 %v497
    %v813 = vunpack.c.l.b16 %v498
    %v814 = vunpack.c.h.b16 %v498
    %v815 = vunpack.c.l.b16 %v499
    %v816 = vunpack.c.l.b16 %v500
    %v817 = vunpack.c.h.b16 %v500
    %v818 = vunpack.c.l.b16 %v501
    %v819 = vunpack.c.l.b16 %v502
    %v820 = vunpack.c.h.b16 %v502
    %v821 = vunpack.c.l.b16 %v503
    %v822 = vunpack.c.l.b16 %v504
    %v823 = vunpack.c.h.b16 %v504
    %v824 = vunpack.c.l.b16 %v505
    %v825 = vunpack.c.l.b16 %v506
    %v826 = vunpack.c.h.b16 %v506
    %v827 = vunpack.c.l.b16 %v507
    %v828 = vunpack.c.l.b16 %v508
    %v829 = vunpack.c.h.b16 %v508
    %v830 = vunpack.c.l.b16 %v509
    %v831 = vunpack.c.l.b16 %v510
    %v832 = vunpack.c.h.b16 %v510
    %v833 = vunpack.c.l.b16 %v511
    %v834 = vunpack.c.l.b16 %v512
    %v835 = vunpack.c.h.b16 %v512
    %v836 = vunpack.c.l.b16 %v513
    %v837 = vunpack.c.l.b16 %v514
    %v838 = vunpack.c.h.b16 %v514
    %v839 = vunpack.c.l.b16 %v515
    %v840 = vunpack.c.l.b16 %v516
    %v841 = vunpack.c.h.b16 %v516
    %v842 = vunpack.c.l.b16 %v517
    %v843 = vunpack.c.l.b16 %v518
    %v844 = vunpack.c.h.b16 %v518
    %v845 = vunpack.c.l.b16 %v519
    %v846 = vunpack.c.l.b16 %v520
    %v847 = vunpack.c.h.b16 %v520
    %v848 = vunpack.c.l.b16 %v521
    %v849 = vunpack.c.l.b16 %v522
    %v850 = vunpack.c.h.b16 %v522
    %v851 = vunpack.c.l.b16 %v523
    %v852 = vunpack.c.l.b16 %v524
    %v853 = vunpack.c.h.b16 %v524
    %v854 = vunpack.c.l.b16 %v525
    %v855 = vunpack.c.l.b16 %v526
    %v856 = vunpack.c.h.b16 %v526
    %v857 = vunpack.c.l.b16 %v527
    %v858 = vunpack.c.l.b16 %v528
    %v859 = vunpack.c.h.b16 %v528
    %v860 = vunpack.c.l.b16 %v529
    %v861 = vunpack.c.l.b16 %v530
    %v862 = vunpack.c.h.b16 %v530
    %v863 = vunpack.c.l.b16 %v531
    %v864 = vunpack.c.l.b16 %v532
    %v865 = vunpack.c.h.b16 %v532
    %v866 = vunpack.c.l.b16 %v533
    %v867 = vunpack.c.l.b16 %v534
    %v868 = vunpack.c.h.b16 %v534
    %v869 = vunpack.c.l.b16 %v535
    %v870 = vunpack.c.l.b16 %v536
    %v871 = vunpack.c.h.b16 %v536
    %v872 = vunpack.c.l.b16 %v537
    %v873 = vunpack.c.l.b16 %v538
    %v874 = vunpack.c.h.b16 %v538
    %v875 = vunpack.c.l.b16 %v539
    %v876 = vunpack.c.l.b16 %v540
    %v877 = vunpack.c.h.b16 %v540
    %v878 = vunpack.c.l.b16 %v541
    %v879 = vpack.c.b16 %v690, %v687
    %v880 = vpack.c.b16 %v691, %v688
    %v881 = vpack.c.b16 %v692, %v689
    %v882 = vpack.c.b16 %v696, %v693
    %v883 = vpack.c.b16 %v697, %v694
    %v884 = vpack.c.b16 %v698, %v695
    %v885 = vpack.c.b16 %v702, %v699
    %v886 = vpack.c.b16 %v703, %v700
    %v887 = vpack.c.b16 %v704, %v701
    %v888 = vpack.c.b16 %v708, %v705
    %v889 = vpack.c.b16 %v709, %v706
    %v890 = vpack.c.b16 %v710, %v707
    %v891 = vpack.c.b16 %v714, %v711
    %v892 = vpack.c.b16 %v715, %v712
    %v893 = vpack.c.b16 %v716, %v713
    %v894 = vpack.c.b16 %v720, %v717
    %v895 = vpack.c.b16 %v721, %v718
    %v896 = vpack.c.b16 %v722, %v719
    %v897 = vpack.c.b16 %v726, %v723
    %v898 = vpack.c.b16 %v727, %v724
    %v899 = vpack.c.b16 %v728, %v725
    %v900 = vpack.c.b16 %v732, %v729
    %v901 = vpack.c.b16 %v733, %v730
    %v902 = vpack.c.b16 %v734, %v731
    %v903 = vpack.c.b16 %v738, %v735
    %v904 = vpack.c.b16 %v739, %v736
    %v905 = vpack.c.b16 %v740, %v737
    %v906 = vpack.c.b16 %v744, %v741
    %v907 = vpack.c.b16 %v745, %v742
    %v908 = vpack.c.b16 %v746, %v743
    %v909 = vpack.c.b16 %v750, %v747
    %v910 = vpack.c.b16 %v751, %v748
    %v911 = vpack.c.b16 %v752, %v749
    %v912 = vpack.c.b16 %v756, %v753
    %v913 = vpack.c.b16 %v757, %v754
    %v914 = vpack.c.b16 %v758, %v755
    %v915 = vpack.c.b16 %v762, %v759
    %v916 = vpack.c.b16 %v763, %v760
    %v917 = vpack.c.b16 %v764, %v761
    %v918 = vpack.c.b16 %v768, %v765
    %v919 = vpack.c.b16 %v769, %v766
    %v920 = vpack.c.b16 %v770, %v767
    %v921 = vpack.c.b16 %v774, %v771
    %v922 = vpack.c.b16 %v775, %v772
    %v923 = vpack.c.b16 %v776, %v773
    %v924 = vpack.c.b16 %v780, %v777
    %v925 = vpack.c.b16 %v781, %v778
    %v926 = vpack.c.b16 %v782, %v779
    %v927 = vpack.c.b16 %v786, %v783
    %v928 = vpack.c.b16 %v787, %v784
    %v929 = vpack.c.b16 %v788, %v785
    %v930 = vpack.c.b16 %v792, %v789
    %v931 = vpack.c.b16 %v793, %v790
    %v932 = vpack.c.b16 %v794, %v791
    %v933 = vpack.c.b16 %v798, %v795
    %v934 = vpack.c.b16 %v799, %v796
    %v935 = vpack.c.b16 %v800, %v797
    %v936 = vpack.c.b16 %v804, %v801
    %v937 = vpack.c.b16 %v805, %v802
    %v938 = vpack.c.b16 %v806, %v803
    %v939 = vpack.c.b16 %v810, %v807
    %v940 = vpack.c.b16 %v811, %v808
    %v941 = vpack.c.b16 %v812, %v809
    %v942 = vpack.c.b16 %v816, %v813
    %v943 = vpack.c.b16 %v817, %v814
    %v944 = vpack.c.b16 %v818, %v815
    %v945 = vpack.c.b16 %v822, %v819
    %v946 = vpack.c.b16 %v823, %v820
    %v947 = vpack.c.b16 %v824, %v821
    %v948 = vpack.c.b16 %v828, %v825
    %v949 = vpack.c.b16 %v829, %v826
    %v950 = vpack.c.b16 %v830, %v827
    %v951 = vpack.c.b16 %v834, %v831
    %v952 = vpack.c.b16 %v835, %v832
    %v953 = vpack.c.b16 %v836, %v833
    %v954 = vpack.c.b16 %v840, %v837
    %v955 = vpack.c.b16 %v841, %v838
    %v956 = vpack.c.b16 %v842, %v839
    %v957 = vpack.c.b16 %v846, %v843
    %v958 = vpack.c.b16 %v847, %v844
    %v959 = vpack.c.b16 %v848, %v845
    %v960 = vpack.c.b16 %v852, %v849
    %v961 = vpack.c.b16 %v853, %v850
    %v962 = vpack.c.b16 %v854, %v851
    %v963 = vpack.c.b16 %v858, %v855
    %v964 = vpack.c.b16 %v859, %v856
    %v965 = vpack.c.b16 %v860, %v857
    %v966 = vpack.c.b16 %v864, %v861
    %v967 = vpack.c.b16 %v865, %v862
    %v968 = vpack.c.b16 %v866, %v863
    %v969 = vpack.c.b16 %v870, %v867
    %v970 = vpack.c.b16 %v871, %v868
    %v971 = vpack.c.b16 %v872, %v869
    %v972 = vpack.c.b16 %v876, %v873
    %v973 = vpack.c.b16 %v877, %v874
    %v974 = vpack.c.b16 %v878, %v875
    %1071 = vmatprep.subr.bf16.mxu0 %v901
    %1072 = vmatpush1.bf16.msra.mxu0 %v900
    %1073 = vmatprep.subr.bf16.mxu0 %v898
    %1074 = vmatpush1.bf16.msra.mxu0 %v897
    %1075 = vmatprep.subr.bf16.mxu0 %v895
    %1076 = vmatpush1.bf16.msra.mxu0 %v894
    %1077 = vmatprep.subr.bf16.mxu0 %v892
    %1078 = vmatpush1.bf16.msra.mxu0 %v891
    %1079 = vmatprep.subr.bf16.mxu0 %v889
    %1080 = vmatpush1.bf16.msra.mxu0 %v888
    %1081 = vmatprep.subr.bf16.mxu0 %v886
    %1082 = vmatpush1.bf16.msra.mxu0 %v885
    %1083 = vmatprep.subr.bf16.mxu0 %v883
    %1084 = vmatpush1.bf16.msra.mxu0 %v882
    %1085 = vmatprep.subr.bf16.mxu0 %v880
    %1086 = vmatpush1.bf16.msra.mxu0 %v879
    %1087 = vmatprep.subr.bf16.mxu0 %v925
    %1088 = vmatpush2.bf16.msra.mxu0 %v924
    %1089 = vmatprep.subr.bf16.mxu0 %v922
    %1090 = vmatpush2.bf16.msra.mxu0 %v921
    %1091 = vmatprep.subr.bf16.mxu0 %v919
    %1092 = vmatpush2.bf16.msra.mxu0 %v918
    %1093 = vmatprep.subr.bf16.mxu0 %v916
    %1094 = vmatpush2.bf16.msra.mxu0 %v915
    %1095 = vmatprep.subr.bf16.mxu0 %v913
    %1096 = vmatpush2.bf16.msra.mxu0 %v912
    %1097 = vmatprep.subr.bf16.mxu0 %v910
    %1098 = vmatpush2.bf16.msra.mxu0 %v909
    %1099 = vmatprep.subr.bf16.mxu0 %v907
    %1100 = vmatpush2.bf16.msra.mxu0 %v906
    %1101 = vmatprep.subr.bf16.mxu0 %v904
    %1102 = vmatpush2.bf16.msra.mxu0 %v903
    %1103 = vmatprep.mubr.bf16.mxu0 %v411
    %1104 = vmatmul.mubr.bf16.gmra.mxu0 %v410
    %v1105 = vpop.f32.mrf.mxu0
    %v1106 = vadd.f32 %v547, %v1105
    %v1107 = vpop.f32.mrf.mxu0
    %v1108 = vadd.f32 %v551, %v1107
    %v1109 = vpop.f32.mrf.mxu0
    %v1110 = vadd.f32 %v547, %v1109
    %v1111 = vpop.f32.mrf.mxu0
    %v1112 = vadd.f32 %v551, %v1111
    %1113 = vdwg.mxu0
    %1114 = vmatprep.subr.bf16.mxu0 %v949
    %1115 = vmatpush1.bf16.msra.mxu0 %v948
    %1116 = vmatprep.subr.bf16.mxu0 %v946
    %1117 = vmatpush1.bf16.msra.mxu0 %v945
    %1118 = vmatprep.subr.bf16.mxu0 %v943
    %1119 = vmatpush1.bf16.msra.mxu0 %v942
    %1120 = vmatprep.subr.bf16.mxu0 %v940
    %1121 = vmatpush1.bf16.msra.mxu0 %v939
    %1122 = vmatprep.subr.bf16.mxu0 %v937
    %1123 = vmatpush1.bf16.msra.mxu0 %v936
    %1124 = vmatprep.subr.bf16.mxu0 %v934
    %1125 = vmatpush1.bf16.msra.mxu0 %v933
    %1126 = vmatprep.subr.bf16.mxu0 %v931
    %1127 = vmatpush1.bf16.msra.mxu0 %v930
    %1128 = vmatprep.subr.bf16.mxu0 %v928
    %1129 = vmatpush1.bf16.msra.mxu0 %v927
    %1130 = vmatprep.subr.bf16.mxu0 %v973
    %1131 = vmatpush2.bf16.msra.mxu0 %v972
    %1132 = vmatprep.subr.bf16.mxu0 %v970
    %1133 = vmatpush2.bf16.msra.mxu0 %v969
    %1134 = vmatprep.subr.bf16.mxu0 %v967
    %1135 = vmatpush2.bf16.msra.mxu0 %v966
    %1136 = vmatprep.subr.bf16.mxu0 %v964
    %1137 = vmatpush2.bf16.msra.mxu0 %v963
    %1138 = vmatprep.subr.bf16.mxu0 %v961
    %1139 = vmatpush2.bf16.msra.mxu0 %v960
    %1140 = vmatprep.subr.bf16.mxu0 %v958
    %1141 = vmatpush2.bf16.msra.mxu0 %v957
    %1142 = vmatprep.subr.bf16.mxu0 %v955
    %1143 = vmatpush2.bf16.msra.mxu0 %v954
    %1144 = vmatprep.subr.bf16.mxu0 %v952
    %1145 = vmatpush2.bf16.msra.mxu0 %v951
    %1146 = vmatprep.mubr.bf16.mxu0 %v413
    %1147 = vmatmul.mubr.bf16.gmra.mxu0 %v412
    %v1148 = vpop.f32.mrf.mxu0
    %v1149 = vadd.f32 %v1106, %v1148
    %v1150 = vpop.f32.mrf.mxu0
    %v1151 = vadd.f32 %v1108, %v1150
    %v1152 = vpop.f32.mrf.mxu0
    %v1153 = vadd.f32 %v1110, %v1152
    %v1154 = vpop.f32.mrf.mxu0
    %v1155 = vadd.f32 %v1112, %v1154
    %1156 = vdwg.mxu0
    %1157 = vmatprep.subr.bf16.mxu0 0
    %1158 = vmatpush1.bf16.msra.mxu0 %v902
    %1159 = vmatprep.subr.bf16.mxu0 0
    %1160 = vmatpush1.bf16.msra.mxu0 %v899
    %1161 = vmatprep.subr.bf16.mxu0 0
    %1162 = vmatpush1.bf16.msra.mxu0 %v896
    %1163 = vmatprep.subr.bf16.mxu0 0
    %1164 = vmatpush1.bf16.msra.mxu0 %v893
    %1165 = vmatprep.subr.bf16.mxu0 0
    %1166 = vmatpush1.bf16.msra.mxu0 %v890
    %1167 = vmatprep.subr.bf16.mxu0 0
    %1168 = vmatpush1.bf16.msra.mxu0 %v887
    %1169 = vmatprep.subr.bf16.mxu0 0
    %1170 = vmatpush1.bf16.msra.mxu0 %v884
    %1171 = vmatprep.subr.bf16.mxu0 0
    %1172 = vmatpush1.bf16.msra.mxu0 %v881
    %1173 = vmatprep.subr.bf16.mxu0 0
    %1174 = vmatpush2.bf16.msra.mxu0 %v926
    %1175 = vmatprep.subr.bf16.mxu0 0
    %1176 = vmatpush2.bf16.msra.mxu0 %v923
    %1177 = vmatprep.subr.bf16.mxu0 0
    %1178 = vmatpush2.bf16.msra.mxu0 %v920
    %1179 = vmatprep.subr.bf16.mxu0 0
    %1180 = vmatpush2.bf16.msra.mxu0 %v917
    %1181 = vmatprep.subr.bf16.mxu0 0
    %1182 = vmatpush2.bf16.msra.mxu0 %v914
    %1183 = vmatprep.subr.bf16.mxu0 0
    %1184 = vmatpush2.bf16.msra.mxu0 %v911
    %1185 = vmatprep.subr.bf16.mxu0 0
    %1186 = vmatpush2.bf16.msra.mxu0 %v908
    %1187 = vmatprep.subr.bf16.mxu0 0
    %1188 = vmatpush2.bf16.msra.mxu0 %v905
    %1189 = vmatprep.mubr.bf16.mxu0 %v411
    %1190 = vmatmul.mubr.bf16.gmra.mxu0 %v410
    %v1191 = vpop.f32.mrf.mxu0
    %v1192 = vadd.f32 %v555, %v1191
    %v1193 = vpop.f32.mrf.mxu0
    %v1194 = vpop.f32.mrf.mxu0
    %v1195 = vadd.f32 %v555, %v1194
    %v1196 = vpop.f32.mrf.mxu0
    %1197 = vdwg.mxu0
    %1198 = vmatprep.subr.bf16.mxu0 0
    %1199 = vmatpush1.bf16.msra.mxu0 %v950
    %1200 = vmatprep.subr.bf16.mxu0 0
    %1201 = vmatpush1.bf16.msra.mxu0 %v947
    %1202 = vmatprep.subr.bf16.mxu0 0
    %1203 = vmatpush1.bf16.msra.mxu0 %v944
    %1204 = vmatprep.subr.bf16.mxu0 0
    %1205 = vmatpush1.bf16.msra.mxu0 %v941
    %1206 = vmatprep.subr.bf16.mxu0 0
    %1207 = vmatpush1.bf16.msra.mxu0 %v938
    %1208 = vmatprep.subr.bf16.mxu0 0
    %1209 = vmatpush1.bf16.msra.mxu0 %v935
    %1210 = vmatprep.subr.bf16.mxu0 0
    %1211 = vmatpush1.bf16.msra.mxu0 %v932
    %1212 = vmatprep.subr.bf16.mxu0 0
    %1213 = vmatpush1.bf16.msra.mxu0 %v929
    %1214 = vmatprep.subr.bf16.mxu0 0
    %1215 = vmatpush2.bf16.msra.mxu0 %v974
    %1216 = vmatprep.subr.bf16.mxu0 0
    %1217 = vmatpush2.bf16.msra.mxu0 %v971
    %1218 = vmatprep.subr.bf16.mxu0 0
    %1219 = vmatpush2.bf16.msra.mxu0 %v968
    %1220 = vmatprep.subr.bf16.mxu0 0
    %1221 = vmatpush2.bf16.msra.mxu0 %v965
    %1222 = vmatprep.subr.bf16.mxu0 0
    %1223 = vmatpush2.bf16.msra.mxu0 %v962
    %1224 = vmatprep.subr.bf16.mxu0 0
    %1225 = vmatpush2.bf16.msra.mxu0 %v959
    %1226 = vmatprep.subr.bf16.mxu0 0
    %1227 = vmatpush2.bf16.msra.mxu0 %v956
    %1228 = vmatprep.subr.bf16.mxu0 0
    %1229 = vmatpush2.bf16.msra.mxu0 %v953
    %1230 = vmatprep.mubr.bf16.mxu0 %v413
    %1231 = vmatmul.mubr.bf16.gmra.mxu0 %v412
    %v1232 = vpop.f32.mrf.mxu0
    %v1233 = vadd.f32 %v1192, %v1232
    %v1234 = vpop.f32.mrf.mxu0
    %v1235 = vpop.f32.mrf.mxu0
    %v1236 = vadd.f32 %v1195, %v1235
    %v1237 = vpop.f32.mrf.mxu0
    %1238 = vdwg.mxu0
    %v1239 = vmax.f32 %v1149, 0.0
    %v1240 = vmax.f32 %v1151, 0.0
    %v1241 = vmax.f32 %v1233, 0.0
    %v1242 = vmax.f32 %v1153, 0.0
    %v1243 = vmax.f32 %v1155, 0.0
    %v1244 = vmax.f32 %v1236, 0.0
    %v1245 = vpack.c.bf16 %v1242, %v1239
    %v1246 = vpack.c.bf16 %v1243, %v1240
    %v1247 = vpack.c.bf16 %v1244, %v1241
    %v1248 = vld [vmem:[#allocation10] sm:$0xf]
    %v1249 = vld [vmem:[#allocation10 + $0x4] sm:$0xf]
    %v1250 = vld [vmem:[#allocation10 + $0x8] sm:$0xf]
    %v1251 = vld [vmem:[#allocation10 + $0xc] sm:$0xf]
    %v1252 = vld [vmem:[#allocation10 + $0x10] sm:$0xf]
    %v1253 = vld [vmem:[#allocation10 + $0x14] sm:$0xf]
    %v1254 = vld [vmem:[#allocation10 + $0x18] sm:$0xf]
    %v1255 = vld [vmem:[#allocation10 + $0x1c] sm:$0xf]
    %v1256 = vld [vmem:[#allocation10 + $0x20] sm:$0xf]
    %v1257 = vld [vmem:[#allocation10 + $0x24] sm:$0xf]
    %v1258 = vld [vmem:[#allocation10 + $0x28] sm:$0xf]
    %v1259 = vld [vmem:[#allocation10 + $0x2c] sm:$0xf]
    %v1260 = vld [vmem:[#allocation10 + $0x30] sm:$0xf]
    %v1261 = vld [vmem:[#allocation10 + $0x34] sm:$0xf]
    %v1262 = vld [vmem:[#allocation10 + $0x38] sm:$0xf]
    %v1263 = vld [vmem:[#allocation10 + $0x3c] sm:$0xf]
    %v1264 = vld [vmem:[#allocation10 + $0x40] sm:$0xf]
    %v1265 = vld [vmem:[#allocation10 + $0x44] sm:$0xf]
    %v1266 = vld [vmem:[#allocation10 + $0x48] sm:$0xf]
    %v1267 = vld [vmem:[#allocation10 + $0x4c] sm:$0xf]
    %v1268 = vld [vmem:[#allocation10 + $0x50] sm:$0xf]
    %v1269 = vld [vmem:[#allocation10 + $0x54] sm:$0xf]
    %v1270 = vld [vmem:[#allocation10 + $0x58] sm:$0xf]
    %v1271 = vld [vmem:[#allocation10 + $0x5c] sm:$0xf]
    %v1272 = vld [vmem:[#allocation10 + $0x60] sm:$0xf]
    %v1273 = vld [vmem:[#allocation10 + $0x64] sm:$0xf]
    %v1274 = vld [vmem:[#allocation10 + $0x68] sm:$0xf]
    %v1275 = vld [vmem:[#allocation10 + $0x6c] sm:$0xf]
    %v1276 = vld [vmem:[#allocation10 + $0x70] sm:$0xf]
    %v1277 = vld [vmem:[#allocation10 + $0x74] sm:$0xf]
    %v1278 = vld [vmem:[#allocation10 + $0x78] sm:$0xf]
    %v1279 = vld [vmem:[#allocation10 + $0x7c] sm:$0xf]
    %v1280 = vld [vmem:[#allocation10 + $0x80] sm:$0xf]
    %v1281 = vld [vmem:[#allocation10 + $0x84] sm:$0xf]
    %v1282 = vld [vmem:[#allocation10 + $0x88] sm:$0xf]
    %v1283 = vld [vmem:[#allocation10 + $0x8c] sm:$0xf]
    %v1284 = vld [vmem:[#allocation10 + $0x90] sm:$0xf]
    %v1285 = vld [vmem:[#allocation10 + $0x94] sm:$0xf]
    %v1286 = vld [vmem:[#allocation10 + $0x98] sm:$0xf]
    %v1287 = vld [vmem:[#allocation10 + $0x9c] sm:$0xf]
    %v1288 = vld [vmem:[#allocation10 + $0xa0] sm:$0xf]
    %v1289 = vld [vmem:[#allocation10 + $0xa4] sm:$0xf]
    %v1290 = vld [vmem:[#allocation10 + $0xa8] sm:$0xf]
    %v1291 = vld [vmem:[#allocation10 + $0xac] sm:$0xf]
    %v1292 = vld [vmem:[#allocation10 + $0xb0] sm:$0xf]
    %v1293 = vld [vmem:[#allocation10 + $0xb4] sm:$0xf]
    %v1294 = vld [vmem:[#allocation10 + $0xb8] sm:$0xf]
    %v1295 = vld [vmem:[#allocation10 + $0xbc] sm:$0xf]
    %v1296 = vld [vmem:[%s6] sm:$0x1]
    %v1298 = vlaneseq
    %v1299 = vshrl.u32 %v1298, 7
    %v1300 = vsub.s32 0, %v1299
    %v1301 = vrot.slane %v1296, %v1300
    %v1351 = vunpack.c.l.b16 %v1248
    %v1352 = vunpack.c.l.b16 %v1249
    %v1353 = vunpack.c.l.b16 %v1250
    %v1354 = vunpack.c.l.b16 %v1251
    %v1355 = vunpack.c.l.b16 %v1252
    %v1356 = vunpack.c.l.b16 %v1253
    %v1357 = vunpack.c.l.b16 %v1254
    %v1358 = vunpack.c.l.b16 %v1255
    %v1359 = vunpack.c.l.b16 %v1256
    %v1360 = vunpack.c.l.b16 %v1257
    %v1361 = vunpack.c.l.b16 %v1258
    %v1362 = vunpack.c.l.b16 %v1259
    %v1363 = vunpack.c.l.b16 %v1260
    %v1364 = vunpack.c.l.b16 %v1261
    %v1365 = vunpack.c.l.b16 %v1262
    %v1366 = vunpack.c.l.b16 %v1263
    %v1367 = vunpack.c.l.b16 %v1264
    %v1368 = vunpack.c.l.b16 %v1265
    %v1369 = vunpack.c.l.b16 %v1266
    %v1370 = vunpack.c.l.b16 %v1267
    %v1371 = vunpack.c.l.b16 %v1268
    %v1372 = vunpack.c.l.b16 %v1269
    %v1373 = vunpack.c.l.b16 %v1270
    %v1374 = vunpack.c.l.b16 %v1271
    %v1375 = vunpack.c.l.b16 %v1272
    %v1376 = vunpack.c.l.b16 %v1273
    %v1377 = vunpack.c.l.b16 %v1274
    %v1378 = vunpack.c.l.b16 %v1275
    %v1379 = vunpack.c.l.b16 %v1276
    %v1380 = vunpack.c.l.b16 %v1277
    %v1381 = vunpack.c.l.b16 %v1278
    %v1382 = vunpack.c.l.b16 %v1279
    %v1383 = vunpack.c.l.b16 %v1280
    %v1384 = vunpack.c.l.b16 %v1281
    %v1385 = vunpack.c.l.b16 %v1282
    %v1386 = vunpack.c.l.b16 %v1283
    %v1387 = vunpack.c.l.b16 %v1284
    %v1388 = vunpack.c.l.b16 %v1285
    %v1389 = vunpack.c.l.b16 %v1286
    %v1390 = vunpack.c.l.b16 %v1287
    %v1391 = vunpack.c.l.b16 %v1288
    %v1392 = vunpack.c.l.b16 %v1289
    %v1393 = vunpack.c.l.b16 %v1290
    %v1394 = vunpack.c.l.b16 %v1291
    %v1395 = vunpack.c.l.b16 %v1292
    %v1396 = vunpack.c.l.b16 %v1293
    %v1397 = vunpack.c.l.b16 %v1294
    %v1398 = vunpack.c.l.b16 %v1295
    %v1399 = vpack.c.b16 %v1352, %v1351
    %v1400 = vpack.c.b16 %v1354, %v1353
    %v1401 = vpack.c.b16 %v1356, %v1355
    %v1402 = vpack.c.b16 %v1358, %v1357
    %v1403 = vpack.c.b16 %v1360, %v1359
    %v1404 = vpack.c.b16 %v1362, %v1361
    %v1405 = vpack.c.b16 %v1364, %v1363
    %v1406 = vpack.c.b16 %v1366, %v1365
    %v1407 = vpack.c.b16 %v1368, %v1367
    %v1408 = vpack.c.b16 %v1370, %v1369
    %v1409 = vpack.c.b16 %v1372, %v1371
    %v1410 = vpack.c.b16 %v1374, %v1373
    %v1411 = vpack.c.b16 %v1376, %v1375
    %v1412 = vpack.c.b16 %v1378, %v1377
    %v1413 = vpack.c.b16 %v1380, %v1379
    %v1414 = vpack.c.b16 %v1382, %v1381
    %v1415 = vpack.c.b16 %v1384, %v1383
    %v1416 = vpack.c.b16 %v1386, %v1385
    %v1417 = vpack.c.b16 %v1388, %v1387
    %v1418 = vpack.c.b16 %v1390, %v1389
    %v1419 = vpack.c.b16 %v1392, %v1391
    %v1420 = vpack.c.b16 %v1394, %v1393
    %v1421 = vpack.c.b16 %v1396, %v1395
    %v1422 = vpack.c.b16 %v1398, %v1397
    %1447 = vmatprep.subr.bf16.mxu0 0
    %1448 = vmatpush1.bf16.msra.mxu0 %v1406
    %1449 = vmatprep.subr.bf16.mxu0 0
    %1450 = vmatpush1.bf16.msra.mxu0 %v1405
    %1451 = vmatprep.subr.bf16.mxu0 0
    %1452 = vmatpush1.bf16.msra.mxu0 %v1404
    %1453 = vmatprep.subr.bf16.mxu0 0
    %1454 = vmatpush1.bf16.msra.mxu0 %v1403
    %1455 = vmatprep.subr.bf16.mxu0 0
    %1456 = vmatpush1.bf16.msra.mxu0 %v1402
    %1457 = vmatprep.subr.bf16.mxu0 0
    %1458 = vmatpush1.bf16.msra.mxu0 %v1401
    %1459 = vmatprep.subr.bf16.mxu0 0
    %1460 = vmatpush1.bf16.msra.mxu0 %v1400
    %1461 = vmatprep.subr.bf16.mxu0 0
    %1462 = vmatpush1.bf16.msra.mxu0 %v1399
    %1463 = vmatprep.subr.bf16.mxu0 0
    %1464 = vmatpush2.bf16.msra.mxu0 %v1414
    %1465 = vmatprep.subr.bf16.mxu0 0
    %1466 = vmatpush2.bf16.msra.mxu0 %v1413
    %1467 = vmatprep.subr.bf16.mxu0 0
    %1468 = vmatpush2.bf16.msra.mxu0 %v1412
    %1469 = vmatprep.subr.bf16.mxu0 0
    %1470 = vmatpush2.bf16.msra.mxu0 %v1411
    %1471 = vmatprep.subr.bf16.mxu0 0
    %1472 = vmatpush2.bf16.msra.mxu0 %v1410
    %1473 = vmatprep.subr.bf16.mxu0 0
    %1474 = vmatpush2.bf16.msra.mxu0 %v1409
    %1475 = vmatprep.subr.bf16.mxu0 0
    %1476 = vmatpush2.bf16.msra.mxu0 %v1408
    %1477 = vmatprep.subr.bf16.mxu0 0
    %1478 = vmatpush2.bf16.msra.mxu0 %v1407
    %1479 = vmatprep.mubr.bf16.mxu0 %v1246
    %1480 = vmatmul.mubr.bf16.gmra.mxu0 %v1245
    %v1481 = vpop.f32.mrf.mxu0
    %v1482 = vadd.f32 %v1301, %v1481
    %v1483 = vpop.f32.mrf.mxu0
    %v1484 = vpop.f32.mrf.mxu0
    %v1485 = vadd.f32 %v1301, %v1484
    %v1486 = vpop.f32.mrf.mxu0
    %1487 = vdwg.mxu0
    %1488 = vmatprep.subr.bf16.mxu0 0
    %1489 = vmatpush1.bf16.msra.mxu0 %v1422
    %1490 = vmatprep.subr.bf16.mxu0 0
    %1491 = vmatpush1.bf16.msra.mxu0 %v1421
    %1492 = vmatprep.subr.bf16.mxu0 0
    %1493 = vmatpush1.bf16.msra.mxu0 %v1420
    %1494 = vmatprep.subr.bf16.mxu0 0
    %1495 = vmatpush1.bf16.msra.mxu0 %v1419
    %1496 = vmatprep.subr.bf16.mxu0 0
    %1497 = vmatpush1.bf16.msra.mxu0 %v1418
    %1498 = vmatprep.subr.bf16.mxu0 0
    %1499 = vmatpush1.bf16.msra.mxu0 %v1417
    %1500 = vmatprep.subr.bf16.mxu0 0
    %1501 = vmatpush1.bf16.msra.mxu0 %v1416
    %1502 = vmatprep.subr.bf16.mxu0 0
    %1503 = vmatpush1.bf16.msra.mxu0 %v1415
    %1504 = vmatprep.subr.bf16.mxu0 0
    %1505 = vmatpush2.bf16.msra.mxu0 0
    %1506 = vmatprep.subr.bf16.mxu0 0
    %1507 = vmatpush2.bf16.msra.mxu0 0
    %1508 = vmatprep.subr.bf16.mxu0 0
    %1509 = vmatpush2.bf16.msra.mxu0 0
    %1510 = vmatprep.subr.bf16.mxu0 0
    %1511 = vmatpush2.bf16.msra.mxu0 0
    %1512 = vmatprep.subr.bf16.mxu0 0
    %1513 = vmatpush2.bf16.msra.mxu0 0
    %1514 = vmatprep.subr.bf16.mxu0 0
    %1515 = vmatpush2.bf16.msra.mxu0 0
    %1516 = vmatprep.subr.bf16.mxu0 0
    %1517 = vmatpush2.bf16.msra.mxu0 0
    %1518 = vmatprep.subr.bf16.mxu0 0
    %1519 = vmatpush2.bf16.msra.mxu0 0
    %1520 = vmatprep.mubr.bf16.mxu0 0
    %1521 = vmatmul.mubr.bf16.gmra.mxu0 %v1247
    %v1522 = vpop.f32.mrf.mxu0
    %v1523 = vadd.f32 %v1482, %v1522
    %v1524 = vpop.f32.mrf.mxu0
    %v1525 = vpop.f32.mrf.mxu0
    %v1526 = vadd.f32 %v1485, %v1525
    %v1527 = vpop.f32.mrf.mxu0
    %1528 = vdwg.mxu0
    %v1529 = vtanh.pop %v1523
    %v1530 = vtanh.pop %v1526
    %v1531 = vmul.f32 %v1529, 2.0
    %v1532 = vmul.f32 %v1530, 2.0
    %1533 = vst [vmem:[#allocation11] sm:$0xff] %v1531
    %1534 = vst [vmem:[#allocation11 + $0x8] sm:$0xff] %v1532
    // Predicated region
    $region50: #{tpu_custom_call.1} parent=1 // pred_check
      _
    $region51: #{tpu_custom_call.1} parent=1 // pred_check_branch
      %1536 = sbr.rel (0) target = $region53
    $region52: #{tpu_custom_call.1} parent=1 // pred_region
      %s1538 = ssub.s32 256, 256
      %1539 = vsyncadd [#allocation4], %s1538
      %s1540 = sshll.u32 [#allocation11], 4
      %s1541 = int_to_ptr.vmem [resolvable:$true] %s1540
      %1546 = dma.vmem_to_hbm [thread:$0]  %s1541, 256, %s7, [#allocation4], 128, 128, 8
    $region53: #{tpu_custom_call.1} parent=1 // pred_fallthru
      _
    // Predicated region
    $region54: #{tpu_custom_call.1} parent=1 // pred_check
      _
    $region55: #{tpu_custom_call.1} parent=1 // pred_check_branch
      %1548 = sbr.rel (0) target = $region57
    $region56: #{tpu_custom_call.1} parent=1 // pred_region
      %1549 = dma.done [#allocation4], 256
    $region57: #{tpu_custom_call.1} parent=1 // pred_fallthru
      _
    %1550 = vsyncpa [#allocation3], 1
    %1551 = vsyncpa [#allocation6], 1
    %1552 = vsyncpa [#allocation9], 1
    %1553 = vsyncpa [#allocation4], 1

</llo_original>
